<compile_context>
chip_gen: v7x
topology: tpu7x:2x2x1
jax: 0.10.0
libtpu: 0.0.40
codegen_flags: <defaults>
</compile_context>

<pallas_src>
import functools

import jax
import jax.numpy as jnp
from jax import lax
from jax.experimental import pallas as pl
from jax.experimental.pallas import tpu as pltpu


# ---------------------------------------------------------------------------
# Kernels
# ---------------------------------------------------------------------------

def _grn_kernel(x_ref, gamma_ref, beta_ref, o_ref):
    """Single-pass GRN: one block = (bn, C, HW) whole batch elements."""
    xf = x_ref[...].astype(jnp.float32)                          # (bn, C, HW)
    # Gx = ||x||_2 over the lane-dense spatial axis, accumulated in f32.
    gx = jnp.sqrt(jnp.sum(xf * xf, axis=-1, keepdims=True))      # (bn, C, 1)
    # Nx = Gx / (mean over channels + 1e-6), per batch element.
    nx = gx / (jnp.mean(gx, axis=1, keepdims=True) + 1e-6)       # (bn, C, 1)
    gamma = gamma_ref[...].astype(jnp.float32)                   # (1, C, 1)
    beta = beta_ref[...].astype(jnp.float32)                     # (1, C, 1)
    # Fold affine + residual into a single per-(batch, channel) scale:
    #   gamma*(x*Nx) + beta + x == x*(gamma*Nx + 1) + beta
    scale = gamma * nx + 1.0                                     # (bn, C, 1)
    o_ref[...] = (xf * scale + beta).astype(o_ref.dtype)


def _grn_ssq_kernel(x_ref, ssq_ref, *, hw, hw_tile):
    """Fallback pass 1: accumulate per-(batch, channel) sum of squares."""
    j = pl.program_id(1)

    @pl.when(j == 0)
    def _():
        ssq_ref[...] = jnp.zeros_like(ssq_ref)

    xf = x_ref[...].astype(jnp.float32)                          # (1, C, T)
    # The last spatial tile may be partial -> mask out-of-range lanes.
    lane = lax.broadcasted_iota(jnp.int32, xf.shape, 2)
    xf = jnp.where(j * hw_tile + lane < hw, xf, 0.0)
    ssq_ref[...] += jnp.sum(xf * xf, axis=-1, keepdims=True)


def _grn_apply_kernel(x_ref, scale_ref, beta_ref, o_ref):
    """Fallback pass 2: out = x * scale + beta (scale folds gamma*Nx + 1)."""
    xf = x_ref[...].astype(jnp.float32)                          # (1, C, T)
    o_ref[...] = (xf * scale_ref[...]
                  + beta_ref[...].astype(jnp.float32)).astype(o_ref.dtype)


# ---------------------------------------------------------------------------
# Wrapper
# ---------------------------------------------------------------------------

def _vmem_budget_bytes():
    """Scoped-VMEM budget derived from this generation's physical VMEM."""
    try:
        phys = int(getattr(pltpu.get_tpu_info(), "vmem_capacity_bytes", 0))
    except Exception:
        phys = 0
    if phys <= 0:
        phys = 64 << 20                     # conservative (v7x-sized) default
    # 128 MiB parts (v5e/v6e): 64 MiB limit; 64 MiB parts (v7x): ~48 MiB.
    return (64 << 20) if phys >= (128 << 20) else (phys * 3) // 4


def grn_pallas(x, gamma, beta, *, force_two_pass=False, hw_tile_override=None):
    """GRN forward. x: (N, C, H, W) NCHW; gamma/beta: (1, C, 1, 1)."""
    N, C, H, W = x.shape
    HW = H * W
    itemsize = jnp.dtype(x.dtype).itemsize

    x3 = x.reshape(N, C, HW)
    gamma3 = gamma.reshape(1, C, 1)
    beta3 = beta.reshape(1, C, 1)

    vmem_limit = _vmem_budget_bytes()

    # VMEM accounting with physically padded tile dims: channel axis pads to
    # 8 sublanes, spatial axis to 128 lanes.
    c_pad = ((C + 7) // 8) * 8
    hw_pad = ((HW + 127) // 128) * 128
    # Per element: 2x double-buffered in + out blocks (itemsize each) plus
    # ~3 f32 temporaries (xf, squares, pre-cast output).
    per_elem = 4 * itemsize + 12
    per_batch_budget = c_pad * hw_pad * per_elem
    per_batch_block = c_pad * hw_pad * itemsize

    total_bytes = x.size * itemsize
    flops = 4 * N * C * HW

    if not force_two_pass and per_batch_budget <= vmem_limit:
        # ------------------------ single-pass path ------------------------
        bn = max(1, min(N, vmem_limit // per_batch_budget))
        # Keep >= 2 grid steps (v7x has 2 TensorCores) as long as blocks stay
        # >= ~2 MiB so per-step overhead remains negligible on v5e/v6e too.
        if N >= 2 and bn >= N and pl.cdiv(N, 2) * per_batch_block >= (2 << 20):
            bn = pl.cdiv(N, 2)
        grid = (pl.cdiv(N, bn),)

        out = pl.pallas_call(
            _grn_kernel,
            out_shape=jax.ShapeDtypeStruct((N, C, HW), x.dtype),
            grid=grid,
            in_specs=[
                pl.BlockSpec((bn, C, HW), lambda i: (i, 0, 0)),
                pl.BlockSpec((1, C, 1), lambda i: (0, 0, 0)),
                pl.BlockSpec((1, C, 1), lambda i: (0, 0, 0)),
            ],
            out_specs=pl.BlockSpec((bn, C, HW), lambda i: (i, 0, 0)),
            compiler_params=pltpu.CompilerParams(
                dimension_semantics=("parallel",),
                vmem_limit_bytes=vmem_limit,
            ),
            cost_estimate=pl.CostEstimate(
                flops=flops, transcendentals=N * C,
                bytes_accessed=2 * total_bytes),
        )(x3, gamma3, beta3)
        return out.reshape(N, C, H, W)

    # --------------------------- two-pass fallback --------------------------
    # One batch's (C, HW) slab exceeds the VMEM budget: tile the spatial axis.
    # Pass 1 accumulates the per-(batch, channel) sum of squares, the tiny
    # Gx/Nx/affine fold runs in plain JAX, pass 2 applies x*scale + beta.
    # TODO(synk): add channel tiling for the extreme case where C alone
    # (c_pad * 128 lanes * budget) overflows VMEM.
    def _pick_tile(per_elem_bytes):
        if hw_tile_override is not None:
            return int(hw_tile_override)
        t = vmem_limit // (per_elem_bytes * c_pad)
        t = max(128, (t // 128) * 128)
        return min(t, hw_pad)

    # Pass 1: 2 double-buffered input blocks + f32 temporaries per element.
    t1 = _pick_tile(2 * itemsize + 12)
    ssq = pl.pallas_call(
        functools.partial(_grn_ssq_kernel, hw=HW, hw_tile=t1),
        out_shape=jax.ShapeDtypeStruct((N, C, 1), jnp.float32),
        grid=(N, pl.cdiv(HW, t1)),
        in_specs=[pl.BlockSpec((1, C, t1), lambda b, j: (b, 0, j))],
        out_specs=pl.BlockSpec((1, C, 1), lambda b, j: (b, 0, 0)),
        compiler_params=pltpu.CompilerParams(
            dimension_semantics=("parallel", "arbitrary"),
            vmem_limit_bytes=vmem_limit,
        ),
        cost_estimate=pl.CostEstimate(
            flops=2 * N * C * HW, transcendentals=0,
            bytes_accessed=total_bytes),
    )(x3)

    gx = jnp.sqrt(ssq)                                            # (N, C, 1)
    nx = gx / (jnp.mean(gx, axis=1, keepdims=True) + 1e-6)
    scale = gamma3.astype(jnp.float32) * nx + 1.0                 # (N, C, 1)

    # Pass 2: 2x double-buffered in + out blocks + f32 temporaries.
    t2 = _pick_tile(4 * itemsize + 12)
    out = pl.pallas_call(
        _grn_apply_kernel,
        out_shape=jax.ShapeDtypeStruct((N, C, HW), x.dtype),
        grid=(N, pl.cdiv(HW, t2)),
        in_specs=[
            pl.BlockSpec((1, C, t2), lambda b, j: (b, 0, j)),
            pl.BlockSpec((1, C, 1), lambda b, j: (b, 0, 0)),
            pl.BlockSpec((1, C, 1), lambda b, j: (0, 0, 0)),
        ],
        out_specs=pl.BlockSpec((1, C, t2), lambda b, j: (b, 0, j)),
        compiler_params=pltpu.CompilerParams(
            dimension_semantics=("parallel", "parallel"),
            vmem_limit_bytes=vmem_limit,
        ),
        cost_estimate=pl.CostEstimate(
            flops=2 * N * C * HW, transcendentals=0,
            bytes_accessed=2 * total_bytes),
    )(x3, scale, beta3)
    return out.reshape(N, C, H, W)


def grn_reference(x, gamma, beta):
    """Pure-JAX reference matching the PyTorch forward exactly."""
    gx = jnp.sqrt(jnp.sum(x * x, axis=(2, 3), keepdims=True))
    nx = gx / (jnp.mean(gx, axis=1, keepdims=True) + 1e-6)
    return gamma * (x * nx) + beta + x


if __name__ == "__main__":
    def _check(out, ref, name):
        assert out.shape == ref.shape, f"{name}: shape {out.shape} vs {ref.shape}"
        err = jnp.max(jnp.abs(out - ref))
        assert jnp.allclose(out, ref, atol=1e-5, rtol=1e-5), (
            f"{name}: max abs diff {err}")

    # Test 1: shapes consistent with the module (batch=2, channels=4, 16x16).
    kx, kg, kb = jax.random.split(jax.random.PRNGKey(0), 3)
    N, C, H, W = 2, 4, 16, 16
    x = jax.random.normal(kx, (N, C, H, W), dtype=jnp.float32)
    # PyTorch initializes gamma/beta to zeros; use small non-zero values so
    # the affine path is actually exercised.
    gamma = 0.1 * jax.random.normal(kg, (1, C, 1, 1), dtype=jnp.float32)
    beta = 0.1 * jax.random.normal(kb, (1, C, 1, 1), dtype=jnp.float32)
    out = jax.block_until_ready(grn_pallas(x, gamma, beta))
    _check(out, grn_reference(x, gamma, beta), "test1")

    # Test 2: non-128-aligned spatial (7x7) and C not a multiple of 8
    # (exercises the full-HW masked-store path; no padding, no slicing).
    kx2, kg2, kb2 = jax.random.split(jax.random.PRNGKey(1), 3)
    N2, C2, H2, W2 = 2, 5, 7, 7
    x2 = jax.random.normal(kx2, (N2, C2, H2, W2), dtype=jnp.float32)
    gamma2 = 0.1 * jax.random.normal(kg2, (1, C2, 1, 1), dtype=jnp.float32)
    beta2 = 0.1 * jax.random.normal(kb2, (1, C2, 1, 1), dtype=jnp.float32)
    out2 = jax.block_until_ready(grn_pallas(x2, gamma2, beta2))
    _check(out2, grn_reference(x2, gamma2, beta2), "test2")

    # Test 3: exercise the two-pass (HW-tiled) fallback with a partial last
    # spatial tile (17*17 = 289 -> tiles of 128, last tile masked).
    kx3, kg3, kb3 = jax.random.split(jax.random.PRNGKey(2), 3)
    N3, C3, H3, W3 = 2, 8, 17, 17
    xt = jax.random.normal(kx3, (N3, C3, H3, W3), dtype=jnp.float32)
    gammat = 0.1 * jax.random.normal(kg3, (1, C3, 1, 1), dtype=jnp.float32)
    betat = 0.1 * jax.random.normal(kb3, (1, C3, 1, 1), dtype=jnp.float32)
    out3 = jax.block_until_ready(
        grn_pallas(xt, gammat, betat, force_two_pass=True, hw_tile_override=128))
    _check(out3, grn_reference(xt, gammat, betat), "test3")

    print("KERNEL_OK")
</pallas_src>

<mosaic_0001>
module attributes {stable_mosaic.version = 11 : i64} {
  func.func @_grn_kernel(%arg0: i32, %arg1: memref<2x4x256xf32, #tpu.memory_space<vmem>>, %arg2: memref<1x4x1xf32, #tpu.memory_space<vmem>>, %arg3: memref<1x4x1xf32, #tpu.memory_space<vmem>>, %arg4: memref<2x4x256xf32, #tpu.memory_space<vmem>>) attributes {dimension_semantics = [#tpu.dimension_semantics<parallel>], iteration_bounds = array<i64: 1>, scalar_prefetch = 0 : i64, scratch_operands = 0 : i64, tpu.core_type = #tpu.core_type<tc>, window_params = [{transform_indices = @transform_0, window_bounds = array<i64: 2, 4, 256>}, {pipeline_mode = #tpu.pipeline_mode<synchronous>, transform_indices = @transform_1, window_bounds = array<i64: 1, 4, 1>}, {pipeline_mode = #tpu.pipeline_mode<synchronous>, transform_indices = @transform_2, window_bounds = array<i64: 1, 4, 1>}, {transform_indices = @transform_3, window_bounds = array<i64: 2, 4, 256>}]} {
    %c0 = arith.constant 0 : index
    %c0_0 = arith.constant 0 : index
    %c0_1 = arith.constant 0 : index
    %0 = vector.load %arg1[%c0, %c0_0, %c0_1] : memref<2x4x256xf32, #tpu.memory_space<vmem>>, vector<2x4x256xf32>
    %1 = arith.mulf %0, %0 : vector<2x4x256xf32>
    %cst = arith.constant dense<0.000000e+00> : vector<2x4xf32>
    %2 = vector.multi_reduction <add>, %1, %cst [2] : vector<2x4x256xf32> to vector<2x4xf32>
    %3 = vector.shape_cast %2 : vector<2x4xf32> to vector<2x4x1xf32>
    %4 = math.sqrt %3 : vector<2x4x1xf32>
    %cst_2 = arith.constant dense<0.000000e+00> : vector<2x1xf32>
    %5 = vector.multi_reduction <add>, %4, %cst_2 [1] : vector<2x4x1xf32> to vector<2x1xf32>
    %6 = vector.shape_cast %5 : vector<2x1xf32> to vector<2x1x1xf32>
    %cst_3 = arith.constant 4.000000e+00 : f32
    %7 = vector.broadcast %cst_3 : f32 to vector<2x1x1xf32>
    %8 = arith.divf %6, %7 : vector<2x1x1xf32>
    %cst_4 = arith.constant 9.99999997E-7 : f32
    %9 = vector.broadcast %cst_4 : f32 to vector<2x1x1xf32>
    %10 = arith.addf %8, %9 : vector<2x1x1xf32>
    %11 = vector.broadcast %10 : vector<2x1x1xf32> to vector<2x4x1xf32>
    %12 = arith.divf %4, %11 : vector<2x4x1xf32>
    %c0_5 = arith.constant 0 : index
    %c0_6 = arith.constant 0 : index
    %c0_7 = arith.constant 0 : index
    %13 = vector.load %arg2[%c0_5, %c0_6, %c0_7] : memref<1x4x1xf32, #tpu.memory_space<vmem>>, vector<1x4x1xf32>
    %c0_8 = arith.constant 0 : index
    %c0_9 = arith.constant 0 : index
    %c0_10 = arith.constant 0 : index
    %14 = vector.load %arg3[%c0_8, %c0_9, %c0_10] : memref<1x4x1xf32, #tpu.memory_space<vmem>>, vector<1x4x1xf32>
    %15 = vector.broadcast %13 : vector<1x4x1xf32> to vector<2x4x1xf32>
    %16 = arith.mulf %15, %12 : vector<2x4x1xf32>
    %cst_11 = arith.constant 1.000000e+00 : f32
    %17 = vector.broadcast %cst_11 : f32 to vector<2x4x1xf32>
    %18 = arith.addf %16, %17 : vector<2x4x1xf32>
    %19 = vector.broadcast %18 : vector<2x4x1xf32> to vector<2x4x256xf32>
    %20 = arith.mulf %0, %19 : vector<2x4x256xf32>
    %21 = vector.broadcast %14 : vector<1x4x1xf32> to vector<2x4x256xf32>
    %22 = arith.addf %20, %21 : vector<2x4x256xf32>
    %c0_12 = arith.constant 0 : index
    %c0_13 = arith.constant 0 : index
    %c0_14 = arith.constant 0 : index
    %23 = vector.load %arg4[%c0_12, %c0_13, %c0_14] : memref<2x4x256xf32, #tpu.memory_space<vmem>>, vector<2x4x256xf32>
    tpu.vector_store %arg4[%c0_12, %c0_13, %c0_14], %22 {strides = array<i32>} : memref<2x4x256xf32, #tpu.memory_space<vmem>>, vector<2x4x256xf32>,
    return
  }
  func.func @transform_0(%arg0: i32) -> (i32, i32, i32) {
    %c0_i32 = arith.constant 0 : i32
    %c0_i32_0 = arith.constant 0 : i32
    %c0_i32_1 = arith.constant 0 : i32
    return %arg0, %c0_i32, %c0_i32_0 : i32, i32, i32
  }
  func.func @transform_1(%arg0: i32) -> (i32, i32, i32) {
    %c0_i32 = arith.constant 0 : i32
    %c0_i32_0 = arith.constant 0 : i32
    %c0_i32_1 = arith.constant 0 : i32
    %c0_i32_2 = arith.constant 0 : i32
    return %c0_i32, %c0_i32_0, %c0_i32_1 : i32, i32, i32
  }
  func.func @transform_2(%arg0: i32) -> (i32, i32, i32) {
    %c0_i32 = arith.constant 0 : i32
    %c0_i32_0 = arith.constant 0 : i32
    %c0_i32_1 = arith.constant 0 : i32
    %c0_i32_2 = arith.constant 0 : i32
    return %c0_i32, %c0_i32_0, %c0_i32_1 : i32, i32, i32
  }
  func.func @transform_3(%arg0: i32) -> (i32, i32, i32) {
    %c0_i32 = arith.constant 0 : i32
    %c0_i32_0 = arith.constant 0 : i32
    %c0_i32_1 = arith.constant 0 : i32
    return %arg0, %c0_i32, %c0_i32_0 : i32, i32, i32
  }
}

</mosaic_0001>

<llo_original>
// kernel: tpu_custom_call.1
$region0: #{tpu_custom_call.1}
  #allocation0 [shape = 'u32[]', space=smem, size = 0x4, offset = 0x4, fixed_abs, tag = 'smem constant byte address 0x4 - core index']
  #allocation1 [shape = 'u32[144,128]{1,0:T(1,128)}', space=vmem, size = 0x12000, scoped, tag = 'internal scratch']
  %s0 = inlined_call_operand.hbm [shape: f32[2,4,256], index: 0, kind: input, shape index: {}]
  %s1 = inlined_call_operand.vmem [shape: f32[1,4,1], index: 1, kind: input, shape index: {}]
  %s2 = inlined_call_operand.vmem [shape: f32[1,4,1], index: 2, kind: input, shape index: {}]
  %s3 = inlined_call_operand.hbm [shape: f32[2,4,256], index: 3, kind: output, shape index: {}]
  %s4 = sld [smem:[#allocation0]]
  $region26: #{tpu_custom_call.1} parent=0
    _
  %s6 = ssub.s32 1, %s4
  %s7 = scalar_select 0, %s6, %s4
  $region1: #{tpu_custom_call.1} parent=0
    #allocation2 [shape = 'u8[8192]{0}', space=vmem, size = 0x2000, scoped, tag = 'input window, operand 0, single buffered']
    #allocation3 [shape = 's32[1]{0}', space=sflag, size = 0x4, scoped, tag = 'scoped memory for tpu_custom_call.1']
    #allocation4 [shape = 's32[1]{0}', space=sflag, size = 0x4, scoped, tag = 'scoped memory for tpu_custom_call.1']
    #allocation5 [shape = 'u8[8192]{0}', space=vmem, size = 0x2000, scoped, tag = 'output window, operand 0, single buffered']
    %8 = vsyncpa [#allocation3], 0
    %9 = vsyncpa [#allocation4], 0
    // Predicated region
    $region2: #{tpu_custom_call.1} parent=1 // pred_check
      _
    $region3: #{tpu_custom_call.1} parent=1 // pred_check_branch
      %11 = sbr.rel (0) target = $region5
    $region4: #{tpu_custom_call.1} parent=1 // pred_region
      %s13 = ssub.s32 256, 256
      %14 = vsyncadd [#allocation3], %s13
      %s15 = sshll.u32 [#allocation2], 4
      %s16 = int_to_ptr.vmem [resolvable:$true] %s15
      %21 = dma.hbm_to_vmem [thread:$0]  %s0, 256, %s16, [#allocation3], 128, 128, 8
    $region5: #{tpu_custom_call.1} parent=1 // pred_fallthru
      _
    // Predicated region
    $region6: #{tpu_custom_call.1} parent=1 // pred_check
      _
    $region7: #{tpu_custom_call.1} parent=1 // pred_check_branch
      %23 = sbr.rel (0) target = $region9
    $region8: #{tpu_custom_call.1} parent=1 // pred_region
      _
    $region9: #{tpu_custom_call.1} parent=1 // pred_fallthru
      _
    // Predicated region
    $region10: #{tpu_custom_call.1} parent=1 // pred_check
      _
    $region11: #{tpu_custom_call.1} parent=1 // pred_check_branch
      %25 = sbr.rel (0) target = $region13
    $region12: #{tpu_custom_call.1} parent=1 // pred_region
      _
    $region13: #{tpu_custom_call.1} parent=1 // pred_fallthru
      _
    // Predicated region
    $region14: #{tpu_custom_call.1} parent=1 // pred_check
      _
    $region15: #{tpu_custom_call.1} parent=1 // pred_check_branch
      %27 = sbr.rel (0) target = $region17
    $region16: #{tpu_custom_call.1} parent=1 // pred_region
      %28 = dma.done [#allocation3], 256
    $region17: #{tpu_custom_call.1} parent=1 // pred_fallthru
      _
    %v29 = vld [vmem:[#allocation2] sm:$0xff]
    %v30 = vld [vmem:[#allocation2 + $0x8] sm:$0xff]
    %v31 = vmul.f32 %v29, %v29
    %v32 = vmul.f32 %v30, %v30
    %v35 = vcombine.high %v31, %v31
    %v36 = vcombine.high %v32, %v32
    %vm39 = vcmask 1043456
    %v40 = vsel %vm39, %v31, 0.0
    %v41 = vsel %vm39, %v35, 0.0
    %v42 = vadd.f32 %v40, %v41
    %43 = vadd.xlane.f32.xlu0 %v42
    %v44 = vpop.xlane.xlu0 %43
    %v45 = vsel %vm39, %v32, 0.0
    %v46 = vsel %vm39, %v36, 0.0
    %v47 = vadd.f32 %v45, %v46
    %48 = vadd.xlane.f32.xlu0 %v47
    %v49 = vpop.xlane.xlu0 %48
    %v50 = vrsqrt.pop %v44
    %v51 = vmul.f32 %v44, %v50
    %vm52 = vcmp.eq.f32.partialorder %v44, inf
    %v53 = vsel %vm52, %v44, %v51
    %vm54 = vcmp.eq.f32.partialorder %v44, 0.0
    %v55 = vand.u32 %v44, 2147483648
    %v56 = vsel %vm54, %v55, %v53
    %v57 = vrsqrt.pop %v49
    %v58 = vmul.f32 %v49, %v57
    %vm59 = vcmp.eq.f32.partialorder %v49, inf
    %v60 = vsel %vm59, %v49, %v58
    %vm61 = vcmp.eq.f32.partialorder %v49, 0.0
    %v62 = vand.u32 %v49, 2147483648
    %v63 = vsel %vm61, %v62, %v60
    %v64 = vsel %vm39, %v56, 0.0
    %v65 = vrot.slane %v64, 4
    %v66 = vadd.f32 %v64, %v65
    %v67 = vrot.slane %v66, 2
    %v68 = vadd.f32 %v66, %v67
    %v69 = vrot.slane %v68, 1
    %v70 = vadd.f32 %v68, %v69
    %v71 = vsel %vm39, %v63, 0.0
    %v72 = vrot.slane %v71, 4
    %v73 = vadd.f32 %v71, %v72
    %v74 = vrot.slane %v73, 2
    %v75 = vadd.f32 %v73, %v74
    %v76 = vrot.slane %v75, 1
    %v77 = vadd.f32 %v75, %v76
    %v78 = vrcp.pop 4.0
    %v79 = vmul.f32 %v70, %v78
    %v80 = vmul.f32 %v77, %v78
    %v81 = vadd.f32 %v79, 1e-06
    %v82 = vadd.f32 %v80, 1e-06
    %v83 = vrcp.pop %v81
    %v84 = vmul.f32 %v56, %v83
    %v85 = vrcp.pop %v82
    %v86 = vmul.f32 %v63, %v85
    %v87 = vld [vmem:[%s1] sm:$0xf]
    %v88 = vld [vmem:[%s2] sm:$0xf]
    %v89 = vmul.f32 %v87, %v84
    %v90 = vmul.f32 %v87, %v86
    %v91 = vadd.f32 %v89, 1.0
    %v92 = vadd.f32 %v90, 1.0
    %94 = vset.pattern.permute.xlu0 0
    %95 = vperm.xlu0 %94, %v91
    %v96 = vpop.permute.xlu0 %95
    %98 = vset.pattern.permute.xlu0 0
    %99 = vperm.xlu0 %98, %v92
    %v100 = vpop.permute.xlu0 %99
    %v102 = vunpack.c.l.s4 839922192
    %v103 = vunpack.c.0.s8 %v102
    %v104 = vlaneseq
    %v105 = vshrl.u32 %v104, 7
    %v106 = vsub.s32 %v103, %v105
    %v107 = vrot.slane %v96, %v106
    %v109 = vunpack.c.l.s4 839922192
    %v110 = vunpack.c.0.s8 %v109
    %v111 = vlaneseq
    %v112 = vshrl.u32 %v111, 7
    %v113 = vsub.s32 %v110, %v112
    %v114 = vrot.slane %v100, %v113
    %v117 = vmul.f32 %v29, %v107
    %v118 = vmul.f32 %v30, %v114
    %120 = vset.pattern.permute.xlu0 0
    %121 = vperm.xlu0 %120, %v88
    %v122 = vpop.permute.xlu0 %121
    %v124 = vunpack.c.l.s4 839922192
    %v125 = vunpack.c.0.s8 %v124
    %v126 = vlaneseq
    %v127 = vshrl.u32 %v126, 7
    %v128 = vsub.s32 %v125, %v127
    %v129 = vrot.slane %v122, %v128
    %v131 = vadd.f32 %v117, %v129
    %v132 = vadd.f32 %v118, %v129
    %133 = vst [vmem:[#allocation5] sm:$0xff] %v131
    %134 = vst [vmem:[#allocation5 + $0x8] sm:$0xff] %v132
    // Predicated region
    $region18: #{tpu_custom_call.1} parent=1 // pred_check
      _
    $region19: #{tpu_custom_call.1} parent=1 // pred_check_branch
      %136 = sbr.rel (0) target = $region21
    $region20: #{tpu_custom_call.1} parent=1 // pred_region
      %s138 = ssub.s32 256, 256
      %139 = vsyncadd [#allocation4], %s138
      %s140 = sshll.u32 [#allocation5], 4
      %s141 = int_to_ptr.vmem [resolvable:$true] %s140
      %146 = dma.vmem_to_hbm [thread:$0]  %s141, 256, %s3, [#allocation4], 128, 128, 8
    $region21: #{tpu_custom_call.1} parent=1 // pred_fallthru
      _
    // Predicated region
    $region22: #{tpu_custom_call.1} parent=1 // pred_check
      _
    $region23: #{tpu_custom_call.1} parent=1 // pred_check_branch
      %148 = sbr.rel (0) target = $region25
    $region24: #{tpu_custom_call.1} parent=1 // pred_region
      %149 = dma.done [#allocation4], 256
    $region25: #{tpu_custom_call.1} parent=1 // pred_fallthru
      _
    %150 = vsyncpa [#allocation3], 1
    %151 = vsyncpa [#allocation4], 1

</llo_original>
